<compile_context>
chip_gen: v7x
topology: tpu7x:2x2x1
jax: 0.10.0
libtpu: 0.0.40
codegen_flags: <defaults>
</compile_context>

<pallas_src>
import functools
import math

import jax
import jax.numpy as jnp
from jax import lax
from jax.experimental import pallas as pl
from jax.experimental.pallas import tpu as pltpu

_INV_SQRT2 = 1.0 / math.sqrt(2.0)


def _round_up(a, b):
    return (a + b - 1) // b * b


def _gelu(x, approximate=False):
    if approximate:
        # tanh approximation -> EUP slot (frees the VALU); small delta vs the
        # torch.nn.GELU() default.
        return jax.nn.gelu(x, approximate=True)
    # Exact erf formulation: matches torch.nn.GELU() default.
    return 0.5 * x * (1.0 + lax.erf(x * _INV_SQRT2))


def _vmem_capacity_bytes():
    try:
        return int(pltpu.get_tpu_info().vmem_capacity_bytes)
    except Exception:  # pragma: no cover - conservative fallback (v7x-sized)
        return 64 << 20


# --------------------------------------------------------------------------
# Kernels
# --------------------------------------------------------------------------
def _glu_kernel_resident(x_ref, w1v1_ref, w2_ref, o_ref, *, tff, approximate):
    """Single d_ff block (weights resident in VMEM); no accumulator scratch."""
    x = x_ref[...]
    # One MXU pass over the fused [W1 | V1] block, f32 accumulation.
    h2 = jnp.dot(x, w1v1_ref[...], preferred_element_type=jnp.float32)
    h = _gelu(h2[:, :tff], approximate) * h2[:, tff:]
    o_ref[...] = jnp.dot(h.astype(w2_ref.dtype), w2_ref[...],
                         preferred_element_type=jnp.float32).astype(o_ref.dtype)


def _glu_kernel_streamed(x_ref, w1v1_ref, w2_ref, o_ref, acc_ref, *, tff,
                         approximate):
    """d_ff streamed in kk blocks; f32 VMEM accumulator resident across kk."""
    kk = pl.program_id(1)

    @pl.when(kk == 0)
    def _init():
        acc_ref[...] = jnp.zeros_like(acc_ref)

    x = x_ref[...]
    h2 = jnp.dot(x, w1v1_ref[...], preferred_element_type=jnp.float32)
    h = _gelu(h2[:, :tff], approximate) * h2[:, tff:]
    acc_ref[...] += jnp.dot(h.astype(w2_ref.dtype), w2_ref[...],
                            preferred_element_type=jnp.float32)

    @pl.when(kk == pl.num_programs(1) - 1)
    def _finalize():
        o_ref[...] = acc_ref[...].astype(o_ref.dtype)


# --------------------------------------------------------------------------
# Weight preparation (once at init, out of the hot path)
# --------------------------------------------------------------------------
def _auto_tff(d_model, d_ff, itemsize):
    """Pick the d_ff block: full d_ff (weight-resident) if it fits VMEM."""
    cap = _vmem_capacity_bytes()
    dff128 = _round_up(d_ff, 128)
    # Worst case: W1V1 (d_model, 2*dff) + W2 (dff, d_model), double-buffered.
    resident_bytes = 2 * (3 * d_model * dff128) * itemsize
    if resident_bytes <= int(0.55 * cap):
        return dff128            # weight-resident fast path
    return 512                   # stream d_ff in lane-dense 512-wide blocks


def prepare_glu_weights(w1, v1, w2, *, tff=None):
    """Pack GLU weights for glu_forward.

    Arguments use nn.Linear weight layouts:
      w1, v1 : (d_ff, d_model)   == nn.Linear(d_model, d_ff).weight
      w2     : (d_model, d_ff)   == nn.Linear(d_ff, d_model).weight

    Returns (w1v1_blocked, w2_padded) with
      w1v1_blocked : (n_kk, d_model, 2*tff)  per-block interleaved [W1_kk | V1_kk]^T
      w2_padded    : (n_kk*tff, d_model)     W2^T, zero-padded along d_ff
    Zero padding of d_ff is exact: GELU(0)*0 contributes 0 through W2.
    """
    d_ff, d_model = w1.shape
    assert v1.shape == (d_ff, d_model)
    assert w2.shape == (d_model, d_ff)
    itemsize = jnp.dtype(w1.dtype).itemsize

    if tff is None:
        tff = _auto_tff(d_model, d_ff, itemsize)
    tff_eff = min(_round_up(tff, 128), _round_up(d_ff, 128))
    dff_pad = _round_up(d_ff, tff_eff)
    n_kk = dff_pad // tff_eff

    # Transpose once so the kernel computes x @ W^T as a plain row-major matmul.
    w1_t = w1.T                      # (d_model, d_ff)
    v1_t = v1.T
    w2_t = w2.T                      # (d_ff, d_model)

    pad_ff = dff_pad - d_ff
    if pad_ff:
        w1_t = jnp.pad(w1_t, ((0, 0), (0, pad_ff)))
        v1_t = jnp.pad(v1_t, ((0, 0), (0, pad_ff)))
        w2_t = jnp.pad(w2_t, ((0, pad_ff), (0, 0)))

    # Per-kk interleave [W1_kk | V1_kk]: one MXU pass of width 2*tff per step,
    # and each kk block is a single contiguous DMA.
    w1_b = w1_t.reshape(d_model, n_kk, tff_eff)
    v1_b = v1_t.reshape(d_model, n_kk, tff_eff)
    w1v1 = jnp.concatenate([w1_b, v1_b], axis=-1)        # (d_model, n_kk, 2*tff)
    w1v1_blocked = jnp.transpose(w1v1, (1, 0, 2))        # (n_kk, d_model, 2*tff)
    return jnp.asarray(w1v1_blocked), jnp.asarray(w2_t)


# --------------------------------------------------------------------------
# Forward
# --------------------------------------------------------------------------
def glu_forward(x, w1v1_blocked, w2_padded, *, tm=None, approximate_gelu=False):
    """GLU FFN forward.  Weights must come from prepare_glu_weights()."""
    orig_shape = x.shape
    d_model = orig_shape[-1]
    n_kk, d_model_w, two_tff = w1v1_blocked.shape
    assert d_model_w == d_model
    tff_eff = two_tff // 2
    dff_pad = n_kk * tff_eff
    assert w2_padded.shape == (dff_pad, d_model)

    x2d = x.reshape(-1, d_model)
    M = x2d.shape[0]
    dtype = x2d.dtype
    itemsize = jnp.dtype(dtype).itemsize
    sub = max(8, 32 // itemsize)                  # sublane packing minimum

    cap = _vmem_capacity_bytes()
    small_vmem = cap <= (64 << 20)                # v7x-like: 2 TCs, 64 MiB VMEM/TC

    # ---- row tile (generation aware) ----------------------------------------
    if tm is None:
        if small_vmem:
            tm = 512                              # ~3.2 TB/s HBM: roofline at modest tm
        else:
            tm = 768 if itemsize <= 2 else 1024   # v5e/v6e: hide the weight stream
    tm_eff = min(_round_up(tm, sub), _round_up(M, sub))
    if small_vmem and M > sub:
        # Keep grid[0] >= 2 so both TensorCores get work on the "parallel" axis.
        tm_eff = min(tm_eff, _round_up(-(-M // 2), sub))

    # ---- VMEM working-set estimate / shrink tm if needed --------------------
    def working_set(tm_e):
        x_t = tm_e * d_model * itemsize
        o_t = tm_e * d_model * itemsize
        w_t = (d_model * 2 * tff_eff + tff_eff * d_model) * itemsize
        acc = 0 if n_kk == 1 else tm_e * d_model * 4
        interm = tm_e * 2 * tff_eff * 4 + tm_e * tff_eff * (4 + itemsize)
        return 2 * (x_t + o_t + w_t) + acc + interm

    budget = int(0.9 * cap)
    while working_set(tm_eff) > budget and tm_eff > sub:
        tm_eff = max(sub, _round_up(tm_eff // 2, sub))

    M_pad = _round_up(M, tm_eff)
    if M_pad != M:
        x2d = jnp.pad(x2d, ((0, M_pad - M), (0, 0)))
    m_tiles = M_pad // tm_eff

    vmem_limit = int(min(budget,
                         max(working_set(tm_eff) * 5 // 4 + (8 << 20), 24 << 20)))

    # ---- advisory cost estimate (includes the weight re-stream factor) ------
    weight_bytes = 3 * d_model * dff_pad * itemsize
    cost = pl.CostEstimate(
        flops=2 * M_pad * d_model * dff_pad * 3,
        transcendentals=M_pad * dff_pad,
        bytes_accessed=(2 * M_pad * d_model * itemsize
                        + weight_bytes * (1 if n_kk == 1 else m_tiles)),
    )

    if n_kk == 1:
        # Weight-resident fast path: constant weight index maps -> weights are
        # DMA'd from HBM once; no reduction axis, no accumulator scratch.
        kernel = functools.partial(_glu_kernel_resident, tff=tff_eff,
                                   approximate=approximate_gelu)
        grid = (m_tiles,)
        in_specs = [
            pl.BlockSpec((tm_eff, d_model), lambda i: (i, 0)),
            pl.BlockSpec((None, d_model, 2 * tff_eff), lambda i: (0, 0, 0)),
            pl.BlockSpec((tff_eff, d_model), lambda i: (0, 0)),
        ]
        out_specs = pl.BlockSpec((tm_eff, d_model), lambda i: (i, 0))
        scratch_shapes = []
        dims = ("parallel",)
    else:
        # Streaming path: d_ff reduction last ("arbitrary") with f32 accumulator.
        kernel = functools.partial(_glu_kernel_streamed, tff=tff_eff,
                                   approximate=approximate_gelu)
        grid = (m_tiles, n_kk)
        in_specs = [
            pl.BlockSpec((tm_eff, d_model), lambda i, kk: (i, 0)),
            pl.BlockSpec((None, d_model, 2 * tff_eff), lambda i, kk: (kk, 0, 0)),
            pl.BlockSpec((tff_eff, d_model), lambda i, kk: (kk, 0)),
        ]
        out_specs = pl.BlockSpec((tm_eff, d_model), lambda i, kk: (i, 0))
        scratch_shapes = [pltpu.VMEM((tm_eff, d_model), jnp.float32)]
        dims = ("parallel", "arbitrary")

    out = pl.pallas_call(
        kernel,
        out_shape=jax.ShapeDtypeStruct((M_pad, d_model), dtype),
        grid_spec=pltpu.PrefetchScalarGridSpec(
            num_scalar_prefetch=0,
            grid=grid,
            in_specs=in_specs,
            out_specs=out_specs,
            scratch_shapes=scratch_shapes,
        ),
        compiler_params=pltpu.CompilerParams(
            dimension_semantics=dims,
            vmem_limit_bytes=vmem_limit,
        ),
        cost_estimate=cost,
    )(x2d, w1v1_blocked, w2_padded)

    if M_pad != M:
        out = out[:M]
    return out.reshape(orig_shape)


def glu(x, w1, v1, w2, **kwargs):
    """One-shot convenience wrapper (prepares weights per call)."""
    return glu_forward(x, *prepare_glu_weights(w1, v1, w2), **kwargs)


def glu_reference(x, w1, v1, w2):
    """Pure-JAX reference with nn.Linear weight layouts."""
    h = _gelu(x @ w1.T) * (x @ v1.T)
    return h @ w2.T


if __name__ == "__main__":
    # Small, lane-friendly shapes consistent with the module.
    batch, seq, d_model, d_ff = 2, 8, 128, 256

    key = jax.random.PRNGKey(0)
    kx, kw1, kv1, kw2 = jax.random.split(key, 4)

    x = jax.random.normal(kx, (batch, seq, d_model), dtype=jnp.float32)
    # nn.Linear weight layouts: w_1/v_1 -> (d_ff, d_model), w_2 -> (d_model, d_ff).
    w1 = jax.random.normal(kw1, (d_ff, d_model), dtype=jnp.float32) * 0.05
    v1 = jax.random.normal(kv1, (d_ff, d_model), dtype=jnp.float32) * 0.05
    w2 = jax.random.normal(kw2, (d_model, d_ff), dtype=jnp.float32) * 0.05

    ref = glu_reference(x, w1, v1, w2)

    # Auto plan: small weights -> weight-resident fast path (single kk block).
    params = prepare_glu_weights(w1, v1, w2)
    out = jax.block_until_ready(glu_forward(x, *params))
    assert out.shape == x.shape
    assert jnp.allclose(out, ref, atol=1e-3, rtol=1e-3), "resident path mismatch"

    # Forced d_ff streaming (tff=128 -> 2 kk steps): exercises the f32
    # accumulator init/finalize reduction path.
    params_s = prepare_glu_weights(w1, v1, w2, tff=128)
    out_s = jax.block_until_ready(glu_forward(x, *params_s))
    assert jnp.allclose(out_s, ref, atol=1e-3, rtol=1e-3), "streamed path mismatch"

    print("KERNEL_OK")
</pallas_src>

<mosaic_0001>
module attributes {stable_mosaic.version = 11 : i64} {
  func.func @_glu_kernel_resident(%arg0: i32, %arg1: memref<8x128xf32, #tpu.memory_space<vmem>>, %arg2: memref<1x128x512xf32, #tpu.memory_space<vmem>>, %arg3: memref<256x128xf32, #tpu.memory_space<vmem>>, %arg4: memref<8x128xf32, #tpu.memory_space<vmem>>) attributes {dimension_semantics = [#tpu.dimension_semantics<parallel>], iteration_bounds = array<i64: 2>, scalar_prefetch = 0 : i64, scratch_operands = 0 : i64, tpu.core_type = #tpu.core_type<tc>, window_params = [{transform_indices = @transform_0, window_bounds = array<i64: 8, 128>}, {pipeline_mode = #tpu.pipeline_mode<synchronous>, transform_indices = @transform_1, window_bounds = array<i64: 1, 128, 512>}, {pipeline_mode = #tpu.pipeline_mode<synchronous>, transform_indices = @transform_2, window_bounds = array<i64: 256, 128>}, {transform_indices = @transform_3, window_bounds = array<i64: 8, 128>}]} {
    %c0 = arith.constant 0 : index
    %c0_0 = arith.constant 0 : index
    %0 = vector.load %arg1[%c0, %c0_0] : memref<8x128xf32, #tpu.memory_space<vmem>>, vector<8x128xf32>
    %c0_1 = arith.constant 0 : index
    %c0_2 = arith.constant 0 : index
    %c0_3 = arith.constant 0 : index
    %1 = vector.load %arg2[%c0_1, %c0_2, %c0_3] : memref<1x128x512xf32, #tpu.memory_space<vmem>>, vector<1x128x512xf32>
    %2 = vector.shape_cast %1 : vector<1x128x512xf32> to vector<128x512xf32>
    %cst = arith.constant dense<0.000000e+00> : vector<8x512xf32>
    %3 = tpu.matmul %0, %2, %cst {dimension_numbers = #tpu.dot_dimension_numbers<[1], [0], [0], [1], [0, 0, 1, 1], [], []>} : vector<8x128xf32>, vector<128x512xf32>, vector<8x512xf32> -> vector<8x512xf32>
    %4 = vector.extract_strided_slice %3 {offsets = [0, 0], sizes = [8, 256], strides = [1, 1]} : vector<8x512xf32> to vector<8x256xf32>
    %cst_4 = arith.constant 5.000000e-01 : f32
    %5 = vector.broadcast %cst_4 : f32 to vector<8x256xf32>
    %6 = arith.mulf %5, %4 : vector<8x256xf32>
    %cst_5 = arith.constant 0.707106769 : f32
    %7 = vector.broadcast %cst_5 : f32 to vector<8x256xf32>
    %8 = arith.mulf %4, %7 : vector<8x256xf32>
    %9 = math.erf %8 : vector<8x256xf32>
    %cst_6 = arith.constant 1.000000e+00 : f32
    %10 = vector.broadcast %cst_6 : f32 to vector<8x256xf32>
    %11 = arith.addf %10, %9 : vector<8x256xf32>
    %12 = arith.mulf %6, %11 : vector<8x256xf32>
    %13 = vector.extract_strided_slice %3 {offsets = [0, 256], sizes = [8, 256], strides = [1, 1]} : vector<8x512xf32> to vector<8x256xf32>
    %14 = arith.mulf %12, %13 : vector<8x256xf32>
    %c0_7 = arith.constant 0 : index
    %c0_8 = arith.constant 0 : index
    %15 = vector.load %arg3[%c0_7, %c0_8] : memref<256x128xf32, #tpu.memory_space<vmem>>, vector<256x128xf32>
    %cst_9 = arith.constant dense<0.000000e+00> : vector<8x128xf32>
    %16 = tpu.matmul %14, %15, %cst_9 {dimension_numbers = #tpu.dot_dimension_numbers<[1], [0], [0], [1], [0, 0, 1, 1], [], []>} : vector<8x256xf32>, vector<256x128xf32>, vector<8x128xf32> -> vector<8x128xf32>
    %c0_10 = arith.constant 0 : index
    %c0_11 = arith.constant 0 : index
    %17 = vector.load %arg4[%c0_10, %c0_11] : memref<8x128xf32, #tpu.memory_space<vmem>>, vector<8x128xf32>
    tpu.vector_store %arg4[%c0_10, %c0_11], %16 {strides = array<i32>} : memref<8x128xf32, #tpu.memory_space<vmem>>, vector<8x128xf32>,
    return
  }
  func.func @transform_0(%arg0: i32) -> (i32, i32) {
    %c0_i32 = arith.constant 0 : i32
    %c0_i32_0 = arith.constant 0 : i32
    return %arg0, %c0_i32 : i32, i32
  }
  func.func @transform_1(%arg0: i32) -> (i32, i32, i32) {
    %c0_i32 = arith.constant 0 : i32
    %c0_i32_0 = arith.constant 0 : i32
    %c0_i32_1 = arith.constant 0 : i32
    %c0_i32_2 = arith.constant 0 : i32
    return %c0_i32, %c0_i32_0, %c0_i32_1 : i32, i32, i32
  }
  func.func @transform_2(%arg0: i32) -> (i32, i32) {
    %c0_i32 = arith.constant 0 : i32
    %c0_i32_0 = arith.constant 0 : i32
    %c0_i32_1 = arith.constant 0 : i32
    return %c0_i32, %c0_i32_0 : i32, i32
  }
  func.func @transform_3(%arg0: i32) -> (i32, i32) {
    %c0_i32 = arith.constant 0 : i32
    %c0_i32_0 = arith.constant 0 : i32
    return %arg0, %c0_i32 : i32, i32
  }
}

</mosaic_0001>

<llo_original>
// kernel: tpu_custom_call.1
$region0: #{tpu_custom_call.1}
  #allocation0 [shape = 'u32[]', space=smem, size = 0x4, offset = 0x4, fixed_abs, tag = 'smem constant byte address 0x4 - core index']
  #allocation1 [shape = 'u32[144,128]{1,0:T(1,128)}', space=vmem, size = 0x12000, scoped, tag = 'internal scratch']
  %s0 = inlined_call_operand.hbm [shape: f32[16,128], index: 0, kind: input, shape index: {}]
  %s1 = inlined_call_operand.hbm [shape: f32[1,128,512], index: 1, kind: input, shape index: {}]
  %s2 = inlined_call_operand.hbm [shape: f32[256,128], index: 2, kind: input, shape index: {}]
  %s3 = inlined_call_operand.hbm [shape: f32[16,128], index: 3, kind: output, shape index: {}]
  %s4 = sld [smem:[#allocation0]]
  $region57: #{tpu_custom_call.1} parent=0
    _
  %s6 = ssub.s32 1, %s4
  %s7 = scalar_select 0, %s6, %s4
  $region1: #{tpu_custom_call.1} parent=0
    #allocation2 [shape = 'u8[8192]{0}', space=vmem, size = 0x2000, scoped, tag = 'input window, operand 0']
    #allocation3 [shape = 's32[2]{0}', space=sflag, size = 0x8, scoped, tag = 'scoped memory for tpu_custom_call.1']
    #allocation4 [shape = 's32[2]{0}', space=sflag, size = 0x8, scoped, tag = 'scoped memory for tpu_custom_call.1']
    #allocation5 [shape = 'u8[262144]{0}', space=vmem, size = 0x40000, scoped, tag = 'input window, operand 1, single buffered']
    #allocation6 [shape = 's32[1]{0}', space=sflag, size = 0x4, scoped, tag = 'scoped memory for tpu_custom_call.1']
    #allocation7 [shape = 'u8[131072]{0}', space=vmem, size = 0x20000, scoped, tag = 'input window, operand 2, single buffered']
    #allocation8 [shape = 'u8[8192]{0}', space=vmem, size = 0x2000, scoped, tag = 'output window, operand 0']
    %8 = vsyncpa [#allocation3], 0
    %s9 = scalar_lea.sflag [#allocation3], 1
    %10 = vsyncpa %s9, 0
    %11 = vsyncpa [#allocation6], 0
    %12 = vsyncpa [#allocation4], 0
    %s13 = scalar_lea.sflag [#allocation4], 1
    %14 = vsyncpa %s13, 0
    loop: start=0, step=1, limit=4
    $region2: #{tpu_custom_call.1} parent=1 // loop_pre_header
      _
    $region3: #{tpu_custom_call.1} parent=1 // loop_header
      %s16 = sphi 0, %s20
      %p17 = scmp.ge.s32.totalorder %s16, 4
      %s26 = sphi 0, %s28
      %s29 = sphi 0, %s26
      %s30 = sphi 0, %s29
      %s46 = sphi 0, %s30
      %s50 = sphi 0, %s50
      %s52 = sphi 0, %s50
      %s53 = sphi 0, %s52
      %s67 = sphi 0, %s53
      %s71 = sphi 0, %s71
      %s73 = sphi 0, %s71
      %s74 = sphi 0, %s73
      %s88 = sphi 0, %s74
      %s94 = sphi 0, %s96
      %s97 = sphi 0, %s94
      %s98 = sphi 0, %s97
      %s114 = sphi 0, %s98
    $region4: #{tpu_custom_call.1} parent=1 // loop_header_branch
      %19 = sbr.rel (%p17) target = $region8
    $region5: #{tpu_custom_call.1} parent=1 // loop_body
      %s21 = ssub.s32 %s16, 1
      %s22 = ssub.s32 %s16, 2
      %s23 = sadd.s32 %s16, 1
      %s24 = ssub.s32 %s16, %s23
      %p25 = scmp.eq.s32.totalorder %s24, 0
      %s27 = sadd.s32 %s26, 1
      %s28 = scalar_select %p25, %s26, %s27
      %p31 = pneg %p25
      %p32 = scmp.eq.s32.totalorder %s16, 1
      %p33 = por %p31, %p32
      %p34 = scmp.ne.s32.totalorder %s26, %s29
      %p35 = scmp.eq.s32.totalorder %s16, 0
      %p36 = por %p34, %p35
      %p37 = scmp.ne.s32.totalorder %s26, %s29
      %p38 = scmp.eq.s32.totalorder %s21, 1
      %p39 = por %p37, %p38
      %p40 = scmp.ne.s32.totalorder %s29, %s30
      %p41 = scmp.eq.s32.totalorder %s21, 0
      %p42 = por %p40, %p41
      %p43 = scmp.ne.s32.totalorder %s29, %s30
      %p44 = scmp.eq.s32.totalorder %s22, 1
      %p45 = por %p43, %p44
      %p47 = scmp.ne.s32.totalorder %s30, %s46
      %p48 = scmp.eq.s32.totalorder %s22, 0
      %p49 = por %p47, %p48
      %s51 = sadd.s32 %s50, 1
      %p54 = scmp.eq.s32.totalorder %s16, 1
      %p55 = scmp.ne.s32.totalorder %s50, %s52
      %p56 = scmp.eq.s32.totalorder %s16, 0
      %p57 = por %p55, %p56
      %p58 = scmp.ne.s32.totalorder %s50, %s52
      %p59 = scmp.eq.s32.totalorder %s21, 1
      %p60 = por %p58, %p59
      %p61 = scmp.ne.s32.totalorder %s52, %s53
      %p62 = scmp.eq.s32.totalorder %s21, 0
      %p63 = por %p61, %p62
      %p64 = scmp.ne.s32.totalorder %s52, %s53
      %p65 = scmp.eq.s32.totalorder %s22, 1
      %p66 = por %p64, %p65
      %p68 = scmp.ne.s32.totalorder %s53, %s67
      %p69 = scmp.eq.s32.totalorder %s22, 0
      %p70 = por %p68, %p69
      %s72 = sadd.s32 %s71, 1
      %p75 = scmp.eq.s32.totalorder %s16, 1
      %p76 = scmp.ne.s32.totalorder %s71, %s73
      %p77 = scmp.eq.s32.totalorder %s16, 0
      %p78 = por %p76, %p77
      %p79 = scmp.ne.s32.totalorder %s71, %s73
      %p80 = scmp.eq.s32.totalorder %s21, 1
      %p81 = por %p79, %p80
      %p82 = scmp.ne.s32.totalorder %s73, %s74
      %p83 = scmp.eq.s32.totalorder %s21, 0
      %p84 = por %p82, %p83
      %p85 = scmp.ne.s32.totalorder %s73, %s74
      %p86 = scmp.eq.s32.totalorder %s22, 1
      %p87 = por %p85, %p86
      %p89 = scmp.ne.s32.totalorder %s74, %s88
      %p90 = scmp.eq.s32.totalorder %s22, 0
      %p91 = por %p89, %p90
      %s92 = ssub.s32 %s16, %s23
      %p93 = scmp.eq.s32.totalorder %s92, 0
      %s95 = sadd.s32 %s94, 1
      %s96 = scalar_select %p93, %s94, %s95
      %p99 = pneg %p93
      %p100 = scmp.eq.s32.totalorder %s16, 1
      %p101 = por %p99, %p100
      %p102 = scmp.ne.s32.totalorder %s94, %s97
      %p103 = scmp.eq.s32.totalorder %s16, 0
      %p104 = por %p102, %p103
      %p105 = scmp.ne.s32.totalorder %s94, %s97
      %p106 = scmp.eq.s32.totalorder %s21, 1
      %p107 = por %p105, %p106
      %p108 = scmp.ne.s32.totalorder %s97, %s98
      %p109 = scmp.eq.s32.totalorder %s21, 0
      %p110 = por %p108, %p109
      %p111 = scmp.ne.s32.totalorder %s97, %s98
      %p112 = scmp.eq.s32.totalorder %s22, 1
      %p113 = por %p111, %p112
      %p115 = scmp.ne.s32.totalorder %s98, %s114
      %p116 = scmp.eq.s32.totalorder %s22, 0
      %p117 = por %p115, %p116
      %p118 = scmp.le.s32.totalorder 1, %s16
      %p119 = scmp.lt.s32.totalorder %s16, 3
      %p120 = pnand %p118, %p119
      %p121 = pneg %p120
      // Predicated region
      $region9: #{tpu_custom_call.1} parent=5 // pred_check
        _
      $region10: #{tpu_custom_call.1} parent=5 // pred_check_branch
        %123 = sbr.rel (%p120) target = $region12
      $region11: #{tpu_custom_call.1} parent=5 // pred_region
        %s124 = ssub.s32 %s16, 1
        // Predicated region
        $region13: #{tpu_custom_call.1} parent=11 // pred_check
          %p125 = pneg %p63
        $region14: #{tpu_custom_call.1} parent=11 // pred_check_branch
          %127 = sbr.rel (%p125) target = $region16
        $region15: #{tpu_custom_call.1} parent=11 // pred_region
          %s129 = ssub.s32 8192, 8192
          %130 = vsyncadd [#allocation6], %s129
          %s131 = sshll.u32 [#allocation5], 4
          %s132 = int_to_ptr.vmem [resolvable:$true] %s131
          %137 = dma.hbm_to_vmem [thread:$0]  %s1, 8192, %s132, [#allocation6], 512, 512, 32
        $region16: #{tpu_custom_call.1} parent=11 // pred_fallthru
          _
        // Predicated region
        $region17: #{tpu_custom_call.1} parent=11 // pred_check
          %p138 = pneg %p84
        $region18: #{tpu_custom_call.1} parent=11 // pred_check_branch
          %140 = sbr.rel (%p138) target = $region20
        $region19: #{tpu_custom_call.1} parent=11 // pred_region
          %s142 = ssub.s32 4096, 4096
          %143 = vsyncadd [#allocation6], %s142
          %s144 = sshll.u32 [#allocation7], 4
          %s145 = int_to_ptr.vmem [resolvable:$true] %s144
          %150 = dma.hbm_to_vmem [thread:$0]  %s2, 4096, %s145, [#allocation6], 128, 128, 8
        $region20: #{tpu_custom_call.1} parent=11 // pred_fallthru
          _
      $region12: #{tpu_custom_call.1} parent=5 // pred_fallthru
        _
      %p151 = scmp.lt.s32.totalorder %s16, 2
      // Predicated region
      $region21: #{tpu_custom_call.1} parent=5 // pred_check
        %p152 = pneg %p151
      $region22: #{tpu_custom_call.1} parent=5 // pred_check_branch
        %154 = sbr.rel (%p152) target = $region24
      $region23: #{tpu_custom_call.1} parent=5 // pred_region
        // Predicated region
        $region25: #{tpu_custom_call.1} parent=23 // pred_check
          %p155 = pneg %p36
        $region26: #{tpu_custom_call.1} parent=23 // pred_check_branch
          %157 = sbr.rel (%p155) target = $region28
        $region27: #{tpu_custom_call.1} parent=23 // pred_region
          %s158 = sand.u32 %s26, 1
          %s159 = scalar_lea.sflag [#allocation3], %s158
          %s160 = sand.u32 %s26, 1
          %s161 = smul.addr %s160, 8
          %s162 = scalar_lea.vmem [#allocation2], %s161
          %s164 = ssub.s32 128, 128
          %165 = vsyncadd %s159, %s164
          %s166 = smul.addr %s16, 128
          %s167 = scalar_lea.hbm %s0, %s166
          %s169 = sshll.u32 %s162, 4
          %s170 = int_to_ptr.vmem [resolvable:$true] %s169
          %172 = dma.hbm_to_vmem [thread:$0]  %s167, 128, %s170, %s159
        $region28: #{tpu_custom_call.1} parent=23 // pred_fallthru
          _
      $region24: #{tpu_custom_call.1} parent=5 // pred_fallthru
        _
      %p173 = scmp.le.s32.totalorder 1, %s16
      %p174 = scmp.lt.s32.totalorder %s16, 3
      %p175 = pnand %p173, %p174
      %p176 = pneg %p175
      // Predicated region
      $region29: #{tpu_custom_call.1} parent=5 // pred_check
        _
      $region30: #{tpu_custom_call.1} parent=5 // pred_check_branch
        %178 = sbr.rel (%p175) target = $region32
      $region31: #{tpu_custom_call.1} parent=5 // pred_region
        %s179 = ssub.s32 %s16, 1
        %s180 = sand.u32 %s29, 1
        %s181 = scalar_lea.sflag [#allocation3], %s180
        %s182 = sand.u32 %s29, 1
        %s183 = smul.addr %s182, 8
        %s184 = scalar_lea.vmem [#allocation2], %s183
        // Predicated region
        $region33: #{tpu_custom_call.1} parent=31 // pred_check
          %p185 = pneg %p42
        $region34: #{tpu_custom_call.1} parent=31 // pred_check_branch
          %187 = sbr.rel (%p185) target = $region36
        $region35: #{tpu_custom_call.1} parent=31 // pred_region
          %188 = dma.done %s181, 128
        $region36: #{tpu_custom_call.1} parent=31 // pred_fallthru
          _
        // Predicated region
        $region37: #{tpu_custom_call.1} parent=31 // pred_check
          %p189 = pneg %p63
        $region38: #{tpu_custom_call.1} parent=31 // pred_check_branch
          %191 = sbr.rel (%p189) target = $region40
        $region39: #{tpu_custom_call.1} parent=31 // pred_region
          %192 = dma.done [#allocation6], 8192
        $region40: #{tpu_custom_call.1} parent=31 // pred_fallthru
          _
        // Predicated region
        $region41: #{tpu_custom_call.1} parent=31 // pred_check
          %p193 = pneg %p84
        $region42: #{tpu_custom_call.1} parent=31 // pred_check_branch
          %195 = sbr.rel (%p193) target = $region44
        $region43: #{tpu_custom_call.1} parent=31 // pred_region
          %196 = dma.done [#allocation6], 4096
        $region44: #{tpu_custom_call.1} parent=31 // pred_fallthru
          _
        %s197 = sand.u32 %s29, 1
        %s198 = scalar_lea.sflag [#allocation3], %s197
        %s199 = sand.u32 %s29, 1
        %s200 = smul.addr %s199, 8
        %s201 = scalar_lea.vmem [#allocation2], %s200
        %p202 = pneg %p42
        %p203 = pneg %p39
        %p204 = pneg %p63
        %p205 = pneg %p60
        %p206 = pneg %p84
        %p207 = pneg %p81
        %p208 = pneg %p110
        %p209 = pneg %p107
        %s210 = sand.u32 %s97, 1
        %s211 = scalar_lea.sflag [#allocation4], %s210
        %s212 = sand.u32 %s97, 1
        %s213 = smul.addr %s212, 8
        %s214 = scalar_lea.vmem [#allocation8], %s213
        %v215 = vld [vmem:[%s184] sm:$0xff]
        %v216 = vld [vmem:[#allocation5] sm:$0xff]
        %v217 = vld [vmem:[#allocation5 + $0x8] sm:$0xff]
        %v218 = vld [vmem:[#allocation5 + $0x10] sm:$0xff]
        %v219 = vld [vmem:[#allocation5 + $0x18] sm:$0xff]
        %v220 = vld [vmem:[#allocation5 + $0x20] sm:$0xff]
        %v221 = vld [vmem:[#allocation5 + $0x28] sm:$0xff]
        %v222 = vld [vmem:[#allocation5 + $0x30] sm:$0xff]
        %v223 = vld [vmem:[#allocation5 + $0x38] sm:$0xff]
        %v224 = vld [vmem:[#allocation5 + $0x40] sm:$0xff]
        %v225 = vld [vmem:[#allocation5 + $0x48] sm:$0xff]
        %v226 = vld [vmem:[#allocation5 + $0x50] sm:$0xff]
        %v227 = vld [vmem:[#allocation5 + $0x58] sm:$0xff]
        %v228 = vld [vmem:[#allocation5 + $0x60] sm:$0xff]
        %v229 = vld [vmem:[#allocation5 + $0x68] sm:$0xff]
        %v230 = vld [vmem:[#allocation5 + $0x70] sm:$0xff]
        %v231 = vld [vmem:[#allocation5 + $0x78] sm:$0xff]
        %v232 = vld [vmem:[#allocation5 + $0x80] sm:$0xff]
        %v233 = vld [vmem:[#allocation5 + $0x88] sm:$0xff]
        %v234 = vld [vmem:[#allocation5 + $0x90] sm:$0xff]
        %v235 = vld [vmem:[#allocation5 + $0x98] sm:$0xff]
        %v236 = vld [vmem:[#allocation5 + $0xa0] sm:$0xff]
        %v237 = vld [vmem:[#allocation5 + $0xa8] sm:$0xff]
        %v238 = vld [vmem:[#allocation5 + $0xb0] sm:$0xff]
        %v239 = vld [vmem:[#allocation5 + $0xb8] sm:$0xff]
        %v240 = vld [vmem:[#allocation5 + $0xc0] sm:$0xff]
        %v241 = vld [vmem:[#allocation5 + $0xc8] sm:$0xff]
        %v242 = vld [vmem:[#allocation5 + $0xd0] sm:$0xff]
        %v243 = vld [vmem:[#allocation5 + $0xd8] sm:$0xff]
        %v244 = vld [vmem:[#allocation5 + $0xe0] sm:$0xff]
        %v245 = vld [vmem:[#allocation5 + $0xe8] sm:$0xff]
        %v246 = vld [vmem:[#allocation5 + $0xf0] sm:$0xff]
        %v247 = vld [vmem:[#allocation5 + $0xf8] sm:$0xff]
        %v248 = vld [vmem:[#allocation5 + $0x100] sm:$0xff]
        %v249 = vld [vmem:[#allocation5 + $0x108] sm:$0xff]
        %v250 = vld [vmem:[#allocation5 + $0x110] sm:$0xff]
        %v251 = vld [vmem:[#allocation5 + $0x118] sm:$0xff]
        %v252 = vld [vmem:[#allocation5 + $0x120] sm:$0xff]
        %v253 = vld [vmem:[#allocation5 + $0x128] sm:$0xff]
        %v254 = vld [vmem:[#allocation5 + $0x130] sm:$0xff]
        %v255 = vld [vmem:[#allocation5 + $0x138] sm:$0xff]
        %v256 = vld [vmem:[#allocation5 + $0x140] sm:$0xff]
        %v257 = vld [vmem:[#allocation5 + $0x148] sm:$0xff]
        %v258 = vld [vmem:[#allocation5 + $0x150] sm:$0xff]
        %v259 = vld [vmem:[#allocation5 + $0x158] sm:$0xff]
        %v260 = vld [vmem:[#allocation5 + $0x160] sm:$0xff]
        %v261 = vld [vmem:[#allocation5 + $0x168] sm:$0xff]
        %v262 = vld [vmem:[#allocation5 + $0x170] sm:$0xff]
        %v263 = vld [vmem:[#allocation5 + $0x178] sm:$0xff]
        %v264 = vld [vmem:[#allocation5 + $0x180] sm:$0xff]
        %v265 = vld [vmem:[#allocation5 + $0x188] sm:$0xff]
        %v266 = vld [vmem:[#allocation5 + $0x190] sm:$0xff]
        %v267 = vld [vmem:[#allocation5 + $0x198] sm:$0xff]
        %v268 = vld [vmem:[#allocation5 + $0x1a0] sm:$0xff]
        %v269 = vld [vmem:[#allocation5 + $0x1a8] sm:$0xff]
        %v270 = vld [vmem:[#allocation5 + $0x1b0] sm:$0xff]
        %v271 = vld [vmem:[#allocation5 + $0x1b8] sm:$0xff]
        %v272 = vld [vmem:[#allocation5 + $0x1c0] sm:$0xff]
        %v273 = vld [vmem:[#allocation5 + $0x1c8] sm:$0xff]
        %v274 = vld [vmem:[#allocation5 + $0x1d0] sm:$0xff]
        %v275 = vld [vmem:[#allocation5 + $0x1d8] sm:$0xff]
        %v276 = vld [vmem:[#allocation5 + $0x1e0] sm:$0xff]
        %v277 = vld [vmem:[#allocation5 + $0x1e8] sm:$0xff]
        %v278 = vld [vmem:[#allocation5 + $0x1f0] sm:$0xff]
        %v279 = vld [vmem:[#allocation5 + $0x1f8] sm:$0xff]
        %280 = vmatprep.subr.mxu0 %v217
        %281 = vmatpush1.msra.mxu0 %v216
        %282 = vmatprep.subr.mxu0 %v221
        %283 = vmatpush1.msra.mxu0 %v220
        %284 = vmatprep.subr.mxu0 %v225
        %285 = vmatpush1.msra.mxu0 %v224
        %286 = vmatprep.subr.mxu0 %v229
        %287 = vmatpush1.msra.mxu0 %v228
        %288 = vmatprep.subr.mxu0 %v233
        %289 = vmatpush1.msra.mxu0 %v232
        %290 = vmatprep.subr.mxu0 %v237
        %291 = vmatpush1.msra.mxu0 %v236
        %292 = vmatprep.subr.mxu0 %v241
        %293 = vmatpush1.msra.mxu0 %v240
        %294 = vmatprep.subr.mxu0 %v245
        %295 = vmatpush1.msra.mxu0 %v244
        %296 = vmatprep.subr.mxu0 %v249
        %297 = vmatpush1.msra.mxu0 %v248
        %298 = vmatprep.subr.mxu0 %v253
        %299 = vmatpush1.msra.mxu0 %v252
        %300 = vmatprep.subr.mxu0 %v257
        %301 = vmatpush1.msra.mxu0 %v256
        %302 = vmatprep.subr.mxu0 %v261
        %303 = vmatpush1.msra.mxu0 %v260
        %304 = vmatprep.subr.mxu0 %v265
        %305 = vmatpush1.msra.mxu0 %v264
        %306 = vmatprep.subr.mxu0 %v269
        %307 = vmatpush1.msra.mxu0 %v268
        %308 = vmatprep.subr.mxu0 %v273
        %309 = vmatpush1.msra.mxu0 %v272
        %310 = vmatprep.subr.mxu0 %v277
        %311 = vmatpush1.msra.mxu0 %v276
        %312 = vmatprep.subr.mxu0 0.0
        %313 = vmatpush1.msra.mxu0 0.0
        %314 = vmatprep.subr.mxu0 0.0
        %315 = vmatpush1.msra.mxu0 0.0
        %316 = vmatprep.subr.mxu0 0.0
        %317 = vmatpush1.msra.mxu0 0.0
        %318 = vmatprep.subr.mxu0 0.0
        %319 = vmatpush1.msra.mxu0 0.0
        %320 = vmatprep.subr.mxu0 0.0
        %321 = vmatpush1.msra.mxu0 0.0
        %322 = vmatprep.subr.mxu0 0.0
        %323 = vmatpush1.msra.mxu0 0.0
        %324 = vmatprep.subr.mxu0 0.0
        %325 = vmatpush1.msra.mxu0 0.0
        %326 = vmatprep.subr.mxu0 0.0
        %327 = vmatpush1.msra.mxu0 0.0
        %328 = vmatprep.subr.mxu0 0.0
        %329 = vmatpush1.msra.mxu0 0.0
        %330 = vmatprep.subr.mxu0 0.0
        %331 = vmatpush1.msra.mxu0 0.0
        %332 = vmatprep.subr.mxu0 0.0
        %333 = vmatpush1.msra.mxu0 0.0
        %334 = vmatprep.subr.mxu0 0.0
        %335 = vmatpush1.msra.mxu0 0.0
        %336 = vmatprep.subr.mxu0 0.0
        %337 = vmatpush1.msra.mxu0 0.0
        %338 = vmatprep.subr.mxu0 0.0
        %339 = vmatpush1.msra.mxu0 0.0
        %340 = vmatprep.subr.mxu0 0.0
        %341 = vmatpush1.msra.mxu0 0.0
        %342 = vmatprep.subr.mxu0 0.0
        %343 = vmatpush1.msra.mxu0 0.0
        %344 = vmatprep.mubr.f32.mxu0 0.0
        %345 = vmatmul.mubr.f32.gmra.mrb[0].mxu0 %v215
        %v346 = vpop.f32.mrb[0].mxu0
        %v347 = vadd.f32 0.0, %v346
        %v348 = vpop.f32.mrb[0].mxu0
        %v349 = vadd.f32 0.0, %v348
        %350 = vdwg.mxu0
        %351 = vmatprep.subr.mxu0 %v219
        %352 = vmatpush1.msra.mxu0 %v218
        %353 = vmatprep.subr.mxu0 %v223
        %354 = vmatpush1.msra.mxu0 %v222
        %355 = vmatprep.subr.mxu0 %v227
        %356 = vmatpush1.msra.mxu0 %v226
        %357 = vmatprep.subr.mxu0 %v231
        %358 = vmatpush1.msra.mxu0 %v230
        %359 = vmatprep.subr.mxu0 %v235
        %360 = vmatpush1.msra.mxu0 %v234
        %361 = vmatprep.subr.mxu0 %v239
        %362 = vmatpush1.msra.mxu0 %v238
        %363 = vmatprep.subr.mxu0 %v243
        %364 = vmatpush1.msra.mxu0 %v242
        %365 = vmatprep.subr.mxu0 %v247
        %366 = vmatpush1.msra.mxu0 %v246
        %367 = vmatprep.subr.mxu0 %v251
        %368 = vmatpush1.msra.mxu0 %v250
        %369 = vmatprep.subr.mxu0 %v255
        %370 = vmatpush1.msra.mxu0 %v254
        %371 = vmatprep.subr.mxu0 %v259
        %372 = vmatpush1.msra.mxu0 %v258
        %373 = vmatprep.subr.mxu0 %v263
        %374 = vmatpush1.msra.mxu0 %v262
        %375 = vmatprep.subr.mxu0 %v267
        %376 = vmatpush1.msra.mxu0 %v266
        %377 = vmatprep.subr.mxu0 %v271
        %378 = vmatpush1.msra.mxu0 %v270
        %379 = vmatprep.subr.mxu0 %v275
        %380 = vmatpush1.msra.mxu0 %v274
        %381 = vmatprep.subr.mxu0 %v279
        %382 = vmatpush1.msra.mxu0 %v278
        %383 = vmatprep.subr.mxu0 0.0
        %384 = vmatpush1.msra.mxu0 0.0
        %385 = vmatprep.subr.mxu0 0.0
        %386 = vmatpush1.msra.mxu0 0.0
        %387 = vmatprep.subr.mxu0 0.0
        %388 = vmatpush1.msra.mxu0 0.0
        %389 = vmatprep.subr.mxu0 0.0
        %390 = vmatpush1.msra.mxu0 0.0
        %391 = vmatprep.subr.mxu0 0.0
        %392 = vmatpush1.msra.mxu0 0.0
        %393 = vmatprep.subr.mxu0 0.0
        %394 = vmatpush1.msra.mxu0 0.0
        %395 = vmatprep.subr.mxu0 0.0
        %396 = vmatpush1.msra.mxu0 0.0
        %397 = vmatprep.subr.mxu0 0.0
        %398 = vmatpush1.msra.mxu0 0.0
        %399 = vmatprep.subr.mxu0 0.0
        %400 = vmatpush1.msra.mxu0 0.0
        %401 = vmatprep.subr.mxu0 0.0
        %402 = vmatpush1.msra.mxu0 0.0
        %403 = vmatprep.subr.mxu0 0.0
        %404 = vmatpush1.msra.mxu0 0.0
        %405 = vmatprep.subr.mxu0 0.0
        %406 = vmatpush1.msra.mxu0 0.0
        %407 = vmatprep.subr.mxu0 0.0
        %408 = vmatpush1.msra.mxu0 0.0
        %409 = vmatprep.subr.mxu0 0.0
        %410 = vmatpush1.msra.mxu0 0.0
        %411 = vmatprep.subr.mxu0 0.0
        %412 = vmatpush1.msra.mxu0 0.0
        %413 = vmatprep.subr.mxu0 0.0
        %414 = vmatpush1.msra.mxu0 0.0
        %415 = vmatprep.mubr.f32.mxu0 0.0
        %416 = vmatmul.mubr.f32.gmra.mrb[0].mxu0 %v215
        %v417 = vpop.f32.mrb[0].mxu0
        %v418 = vadd.f32 0.0, %v417
        %v419 = vpop.f32.mrb[0].mxu0
        %v420 = vadd.f32 0.0, %v419
        %421 = vdwg.mxu0
        %v422 = vmul.f32 %v347, 0.5
        %v423 = vmul.f32 %v349, 0.5
        %v424 = vmul.f32 %v347, 0.70710677
        %v425 = vmul.f32 %v349, 0.70710677
        %v426 = verf.f32.pop %v424
        %v427 = verf.f32.pop %v425
        %v428 = vadd.f32 %v426, 1.0
        %v429 = vadd.f32 %v427, 1.0
        %v430 = vmul.f32 %v422, %v428
        %v431 = vmul.f32 %v423, %v429
        %v432 = vmul.f32 %v430, %v418
        %v433 = vmul.f32 %v431, %v420
        %v434 = vld [vmem:[#allocation7] sm:$0xff]
        %v435 = vld [vmem:[#allocation7 + $0x8] sm:$0xff]
        %v436 = vld [vmem:[#allocation7 + $0x10] sm:$0xff]
        %v437 = vld [vmem:[#allocation7 + $0x18] sm:$0xff]
        %v438 = vld [vmem:[#allocation7 + $0x20] sm:$0xff]
        %v439 = vld [vmem:[#allocation7 + $0x28] sm:$0xff]
        %v440 = vld [vmem:[#allocation7 + $0x30] sm:$0xff]
        %v441 = vld [vmem:[#allocation7 + $0x38] sm:$0xff]
        %v442 = vld [vmem:[#allocation7 + $0x40] sm:$0xff]
        %v443 = vld [vmem:[#allocation7 + $0x48] sm:$0xff]
        %v444 = vld [vmem:[#allocation7 + $0x50] sm:$0xff]
        %v445 = vld [vmem:[#allocation7 + $0x58] sm:$0xff]
        %v446 = vld [vmem:[#allocation7 + $0x60] sm:$0xff]
        %v447 = vld [vmem:[#allocation7 + $0x68] sm:$0xff]
        %v448 = vld [vmem:[#allocation7 + $0x70] sm:$0xff]
        %v449 = vld [vmem:[#allocation7 + $0x78] sm:$0xff]
        %v450 = vld [vmem:[#allocation7 + $0x80] sm:$0xff]
        %v451 = vld [vmem:[#allocation7 + $0x88] sm:$0xff]
        %v452 = vld [vmem:[#allocation7 + $0x90] sm:$0xff]
        %v453 = vld [vmem:[#allocation7 + $0x98] sm:$0xff]
        %v454 = vld [vmem:[#allocation7 + $0xa0] sm:$0xff]
        %v455 = vld [vmem:[#allocation7 + $0xa8] sm:$0xff]
        %v456 = vld [vmem:[#allocation7 + $0xb0] sm:$0xff]
        %v457 = vld [vmem:[#allocation7 + $0xb8] sm:$0xff]
        %v458 = vld [vmem:[#allocation7 + $0xc0] sm:$0xff]
        %v459 = vld [vmem:[#allocation7 + $0xc8] sm:$0xff]
        %v460 = vld [vmem:[#allocation7 + $0xd0] sm:$0xff]
        %v461 = vld [vmem:[#allocation7 + $0xd8] sm:$0xff]
        %v462 = vld [vmem:[#allocation7 + $0xe0] sm:$0xff]
        %v463 = vld [vmem:[#allocation7 + $0xe8] sm:$0xff]
        %v464 = vld [vmem:[#allocation7 + $0xf0] sm:$0xff]
        %v465 = vld [vmem:[#allocation7 + $0xf8] sm:$0xff]
        %466 = vmatprep.subr.mxu0 0.0
        %467 = vmatpush1.msra.mxu0 %v434
        %468 = vmatprep.subr.mxu0 0.0
        %469 = vmatpush1.msra.mxu0 %v435
        %470 = vmatprep.subr.mxu0 0.0
        %471 = vmatpush1.msra.mxu0 %v436
        %472 = vmatprep.subr.mxu0 0.0
        %473 = vmatpush1.msra.mxu0 %v437
        %474 = vmatprep.subr.mxu0 0.0
        %475 = vmatpush1.msra.mxu0 %v438
        %476 = vmatprep.subr.mxu0 0.0
        %477 = vmatpush1.msra.mxu0 %v439
        %478 = vmatprep.subr.mxu0 0.0
        %479 = vmatpush1.msra.mxu0 %v440
        %480 = vmatprep.subr.mxu0 0.0
        %481 = vmatpush1.msra.mxu0 %v441
        %482 = vmatprep.subr.mxu0 0.0
        %483 = vmatpush1.msra.mxu0 %v442
        %484 = vmatprep.subr.mxu0 0.0
        %485 = vmatpush1.msra.mxu0 %v443
        %486 = vmatprep.subr.mxu0 0.0
        %487 = vmatpush1.msra.mxu0 %v444
        %488 = vmatprep.subr.mxu0 0.0
        %489 = vmatpush1.msra.mxu0 %v445
        %490 = vmatprep.subr.mxu0 0.0
        %491 = vmatpush1.msra.mxu0 %v446
        %492 = vmatprep.subr.mxu0 0.0
        %493 = vmatpush1.msra.mxu0 %v447
        %494 = vmatprep.subr.mxu0 0.0
        %495 = vmatpush1.msra.mxu0 %v448
        %496 = vmatprep.subr.mxu0 0.0
        %497 = vmatpush1.msra.mxu0 %v449
        %498 = vmatprep.subr.mxu0 0.0
        %499 = vmatpush1.msra.mxu0 %v450
        %500 = vmatprep.subr.mxu0 0.0
        %501 = vmatpush1.msra.mxu0 %v451
        %502 = vmatprep.subr.mxu0 0.0
        %503 = vmatpush1.msra.mxu0 %v452
        %504 = vmatprep.subr.mxu0 0.0
        %505 = vmatpush1.msra.mxu0 %v453
        %506 = vmatprep.subr.mxu0 0.0
        %507 = vmatpush1.msra.mxu0 %v454
        %508 = vmatprep.subr.mxu0 0.0
        %509 = vmatpush1.msra.mxu0 %v455
        %510 = vmatprep.subr.mxu0 0.0
        %511 = vmatpush1.msra.mxu0 %v456
        %512 = vmatprep.subr.mxu0 0.0
        %513 = vmatpush1.msra.mxu0 %v457
        %514 = vmatprep.subr.mxu0 0.0
        %515 = vmatpush1.msra.mxu0 %v458
        %516 = vmatprep.subr.mxu0 0.0
        %517 = vmatpush1.msra.mxu0 %v459
        %518 = vmatprep.subr.mxu0 0.0
        %519 = vmatpush1.msra.mxu0 %v460
        %520 = vmatprep.subr.mxu0 0.0
        %521 = vmatpush1.msra.mxu0 %v461
        %522 = vmatprep.subr.mxu0 0.0
        %523 = vmatpush1.msra.mxu0 %v462
        %524 = vmatprep.subr.mxu0 0.0
        %525 = vmatpush1.msra.mxu0 %v463
        %526 = vmatprep.subr.mxu0 0.0
        %527 = vmatpush1.msra.mxu0 %v464
        %528 = vmatprep.subr.mxu0 0.0
        %529 = vmatpush1.msra.mxu0 %v465
        %530 = vmatprep.mubr.f32.mxu0 %v433
        %531 = vmatmul.mubr.f32.gmra.mrb[0].mxu0 %v432
        %v532 = vpop.f32.mrb[0].mxu0
        %v533 = vadd.f32 0.0, %v532
        %v534 = vpop.f32.mrb[0].mxu0
        %535 = vdwg.mxu0
        %536 = vst [vmem:[%s214] sm:$0xff] %v533
        %s537 = sand.u32 %s97, 1
        %s538 = scalar_lea.sflag [#allocation4], %s537
        %s539 = sand.u32 %s97, 1
        %s540 = smul.addr %s539, 8
        %s541 = scalar_lea.vmem [#allocation8], %s540
        // Predicated region
        $region45: #{tpu_custom_call.1} parent=31 // pred_check
          %p542 = pneg %p107
        $region46: #{tpu_custom_call.1} parent=31 // pred_check_branch
          %544 = sbr.rel (%p542) target = $region48
        $region47: #{tpu_custom_call.1} parent=31 // pred_region
          %s546 = ssub.s32 128, 128
          %547 = vsyncadd %s538, %s546
          %s548 = smul.addr %s21, 128
          %s549 = scalar_lea.hbm %s3, %s548
          %s551 = sshll.u32 %s541, 4
          %s552 = int_to_ptr.vmem [resolvable:$true] %s551
          %554 = dma.vmem_to_hbm [thread:$0]  %s552, 128, %s549, %s538
        $region48: #{tpu_custom_call.1} parent=31 // pred_fallthru
          _
      $region32: #{tpu_custom_call.1} parent=5 // pred_fallthru
        _
      %p555 = scmp.le.s32.totalorder 2, %s16
      // Predicated region
      $region49: #{tpu_custom_call.1} parent=5 // pred_check
        %p556 = pneg %p555
      $region50: #{tpu_custom_call.1} parent=5 // pred_check_branch
        %558 = sbr.rel (%p556) target = $region52
      $region51: #{tpu_custom_call.1} parent=5 // pred_region
        %s559 = ssub.s32 %s16, 2
        // Predicated region
        $region53: #{tpu_custom_call.1} parent=51 // pred_check
          %p560 = pneg %p113
        $region54: #{tpu_custom_call.1} parent=51 // pred_check_branch
          %562 = sbr.rel (%p560) target = $region56
        $region55: #{tpu_custom_call.1} parent=51 // pred_region
          %s563 = sand.u32 %s98, 1
          %s564 = scalar_lea.sflag [#allocation4], %s563
          %s565 = sand.u32 %s98, 1
          %s566 = smul.addr %s565, 8
          %s567 = scalar_lea.vmem [#allocation8], %s566
          %568 = dma.done %s564, 128
        $region56: #{tpu_custom_call.1} parent=51 // pred_fallthru
          _
      $region52: #{tpu_custom_call.1} parent=5 // pred_fallthru
        _
    $region6: #{tpu_custom_call.1} parent=1 // loop_footer
      %s20 = sadd.s32 1, %s16
    $region7: #{tpu_custom_call.1} parent=1 // loop_footer_branch
      %15 = sbr.rel target = $region3
    $region8: #{tpu_custom_call.1} parent=1 // loop_exit
      _
    %569 = vsyncpa [#allocation3], 1
    %s570 = scalar_lea.sflag [#allocation3], 1
    %571 = vsyncpa %s570, 1
    %572 = vsyncpa [#allocation6], 1
    %573 = vsyncpa [#allocation4], 1
    %s574 = scalar_lea.sflag [#allocation4], 1
    %575 = vsyncpa %s574, 1

</llo_original>
